<compile_context>
chip_gen: v5e
topology: v5e:2x2
jax: 0.10.0
libtpu: 0.0.40
codegen_flags: <defaults>
</compile_context>

<pallas_src>
import functools

import jax
import jax.numpy as jnp
from jax.experimental import pallas as pl
from jax.experimental.pallas import tpu as pltpu


def _round_up(x, m):
    return ((x + m - 1) // m) * m


# ----------------------------------------------------------------------------
# Pallas kernel: full encoder + decoder forward for one batch tile.
# Params arrive pre-folded: (W0,c0)...(W4,c4) are Linear+BN folded, (W5,b5) plain.
# ----------------------------------------------------------------------------
def _mlp_kernel(x_ref,
                w0, c0, w1, c1, w2, c2,
                w3, c3, w4, c4, w5, b5,
                *out_refs, return_feats):
    if return_feats:
        y_ref, f_ref = out_refs
    else:
        (y_ref,) = out_refs

    def lin(h, w_r, c_r, relu=True):
        # MXU matmul with f32 accumulation; operands may be bf16 or f32.
        if h.dtype != w_r.dtype:
            h = h.astype(w_r.dtype)
        z = jnp.dot(h, w_r[...], preferred_element_type=jnp.float32)
        z = z + c_r[...].astype(jnp.float32)        # folded bias+BN shift (VPU, f32)
        return jnp.maximum(z, 0.0) if relu else z   # ReLU; GaussianDropout = identity (eval)

    h = x_ref[...]
    # encoder: input_dim -> 32 -> 64 -> 128
    h = lin(h, w0, c0)
    h = lin(h, w1, c1)
    f = lin(h, w2, c2)
    if return_feats:
        f_ref[...] = f.astype(f_ref.dtype)
    # decoder: 128 -> 64 -> 32 -> 1
    h = lin(f, w3, c3)
    h = lin(h, w4, c4)
    y_ref[...] = lin(h, w5, b5, relu=False).astype(y_ref.dtype)


# ----------------------------------------------------------------------------
# Wrapper: tiles the batch, replicates the (tiny) folded weights across steps.
# ----------------------------------------------------------------------------
def mlp_forward(x, flat_params, *, tile_b=None, return_feats=False):
    B, D_in = x.shape

    if tile_b is None:
        if B >= 1024:
            tile_b = 512                       # >=2 parallel steps (v7x has 2 TCs)
        else:
            tile_b = min(512, _round_up(B, 8))
    tile_b = max(8, _round_up(tile_b, 8))

    Bp = _round_up(B, tile_b)
    xp = x if Bp == B else jnp.pad(x, ((0, Bp - B), (0, 0)))
    n_tiles = Bp // tile_b

    def weight_spec(shape):
        # Constant index map -> block stays VMEM-resident across grid steps.
        return pl.BlockSpec(shape, lambda i: (0, 0))

    in_specs = [pl.BlockSpec((tile_b, D_in), lambda i: (i, 0))]
    in_specs += [weight_spec(p.shape) for p in flat_params]

    out_specs = [pl.BlockSpec((tile_b, 1), lambda i: (i, 0))]
    out_shape = [jax.ShapeDtypeStruct((Bp, 1), jnp.float32)]
    if return_feats:
        out_specs.append(pl.BlockSpec((tile_b, 128), lambda i: (i, 0)))
        out_shape.append(jax.ShapeDtypeStruct((Bp, 128), x.dtype))

    kernel = functools.partial(_mlp_kernel, return_feats=return_feats)
    outs = pl.pallas_call(
        kernel,
        out_shape=out_shape,
        grid_spec=pltpu.PrefetchScalarGridSpec(
            num_scalar_prefetch=0,
            grid=(n_tiles,),
            in_specs=in_specs,
            out_specs=out_specs,
        ),
        compiler_params=pltpu.CompilerParams(
            dimension_semantics=("parallel",)),
    )(xp, *flat_params)

    y = outs[0][:B]
    if return_feats:
        return y, outs[1][:B]
    return y


# ----------------------------------------------------------------------------
# Parameter construction mirroring MLP.__init__, plus the BN/bias fold.
# ----------------------------------------------------------------------------
def make_params(key, input_dim):
    dims = [input_dim, 32, 64, 128, 64, 32, 1]     # encoder [in,32,64,128], decoder [128,64,32,1]
    n_layers = len(dims) - 1
    keys = jax.random.split(key, 4 * n_layers)
    layers = []
    for li in range(n_layers):
        d_in, d_out = dims[li], dims[li + 1]
        kw, kb, kg, kbeta = keys[4 * li: 4 * li + 4]
        layer = dict(
            W=(jax.random.normal(kw, (d_in, d_out), jnp.float32) / jnp.sqrt(d_in)),
            b=0.1 * jax.random.normal(kb, (1, d_out), jnp.float32),
        )
        if li < n_layers - 1:   # every layer except the final decoder Linear has BN
            layer.update(
                gamma=1.0 + 0.1 * jax.random.normal(kg, (1, d_out), jnp.float32),
                beta=0.1 * jax.random.normal(kbeta, (1, d_out), jnp.float32),
                mean=jnp.zeros((1, d_out), jnp.float32),   # PyTorch running-stat defaults
                var=jnp.ones((1, d_out), jnp.float32),
            )
        layers.append(layer)
    return layers


def fold_params(layers, eps=1e-5, weight_dtype=jnp.float32):
    """Fold eval-mode BatchNorm into the Linear weights: W'=W*s, c=b*s+shift."""
    flat = []
    for layer in layers:
        W, b = layer["W"], layer["b"]
        if "gamma" in layer:
            scale = layer["gamma"] / jnp.sqrt(layer["var"] + eps)     # (1, d_out)
            shift = layer["beta"] - layer["mean"] * scale
            W = W * scale
            c = b * scale + shift
        else:
            c = b
        flat.append(W.astype(weight_dtype))   # matmul operand (may be bf16 on v6e/v7x)
        flat.append(c.astype(jnp.float32))    # bias/shift stays f32 for the VPU path
    return flat


# Pure-JAX reference (un-folded math, same order as the PyTorch module).
def mlp_reference(x, layers, eps=1e-5):
    def block(h, layer):
        h = h @ layer["W"] + layer["b"]
        if "gamma" in layer:
            h = (h - layer["mean"]) / jnp.sqrt(layer["var"] + eps)
            h = h * layer["gamma"] + layer["beta"]
            h = jnp.maximum(h, 0.0)
        return h
    h = x
    for layer in layers[:3]:
        h = block(h, layer)
    f = h
    for layer in layers[3:]:
        h = block(h, layer)
    return h, f


if __name__ == "__main__":
    key = jax.random.PRNGKey(0)
    k_params, k_x = jax.random.split(key)

    input_dim = 16
    B = 16
    layers = make_params(k_params, input_dim)
    flat = fold_params(layers)
    x = jax.random.normal(k_x, (B, input_dim), jnp.float32)

    # Full path (y and features) and the y-only fast path.
    y, f = mlp_forward(x, flat, return_feats=True)
    y = jax.block_until_ready(y)
    f = jax.block_until_ready(f)
    y_only = jax.block_until_ready(mlp_forward(x, flat, return_feats=False))

    y_ref, f_ref = mlp_reference(x, layers)

    assert y.shape == (B, 1)
    assert f.shape == (B, 128)
    assert jnp.allclose(y, y_ref, atol=1e-4, rtol=1e-4), "y mismatch vs JAX reference"
    assert jnp.allclose(f, f_ref, atol=1e-4, rtol=1e-4), "f mismatch vs JAX reference"
    assert jnp.allclose(y_only, y, atol=1e-6, rtol=1e-6), "y-only path mismatch"

    print("KERNEL_OK")
</pallas_src>

<mosaic_0001>
module attributes {stable_mosaic.version = 11 : i64} {
  func.func @_mlp_kernel(%arg0: i32, %arg1: memref<16x16xf32, #tpu.memory_space<vmem>>, %arg2: memref<16x32xf32, #tpu.memory_space<vmem>>, %arg3: memref<1x32xf32, #tpu.memory_space<vmem>>, %arg4: memref<32x64xf32, #tpu.memory_space<vmem>>, %arg5: memref<1x64xf32, #tpu.memory_space<vmem>>, %arg6: memref<64x128xf32, #tpu.memory_space<vmem>>, %arg7: memref<1x128xf32, #tpu.memory_space<vmem>>, %arg8: memref<128x64xf32, #tpu.memory_space<vmem>>, %arg9: memref<1x64xf32, #tpu.memory_space<vmem>>, %arg10: memref<64x32xf32, #tpu.memory_space<vmem>>, %arg11: memref<1x32xf32, #tpu.memory_space<vmem>>, %arg12: memref<32x1xf32, #tpu.memory_space<vmem>>, %arg13: memref<1x1xf32, #tpu.memory_space<vmem>>, %arg14: memref<16x1xf32, #tpu.memory_space<vmem>>, %arg15: memref<16x128xf32, #tpu.memory_space<vmem>>) attributes {dimension_semantics = [#tpu.dimension_semantics<parallel>], iteration_bounds = array<i64: 1>, scalar_prefetch = 0 : i64, scratch_operands = 0 : i64, tpu.core_type = #tpu.core_type<tc>, window_params = [{transform_indices = @transform_0, window_bounds = array<i64: 16, 16>}, {pipeline_mode = #tpu.pipeline_mode<synchronous>, transform_indices = @transform_1, window_bounds = array<i64: 16, 32>}, {pipeline_mode = #tpu.pipeline_mode<synchronous>, transform_indices = @transform_2, window_bounds = array<i64: 1, 32>}, {pipeline_mode = #tpu.pipeline_mode<synchronous>, transform_indices = @transform_3, window_bounds = array<i64: 32, 64>}, {pipeline_mode = #tpu.pipeline_mode<synchronous>, transform_indices = @transform_4, window_bounds = array<i64: 1, 64>}, {pipeline_mode = #tpu.pipeline_mode<synchronous>, transform_indices = @transform_5, window_bounds = array<i64: 64, 128>}, {pipeline_mode = #tpu.pipeline_mode<synchronous>, transform_indices = @transform_6, window_bounds = array<i64: 1, 128>}, {pipeline_mode = #tpu.pipeline_mode<synchronous>, transform_indices = @transform_7, window_bounds = array<i64: 128, 64>}, {pipeline_mode = #tpu.pipeline_mode<synchronous>, transform_indices = @transform_8, window_bounds = array<i64: 1, 64>}, {pipeline_mode = #tpu.pipeline_mode<synchronous>, transform_indices = @transform_9, window_bounds = array<i64: 64, 32>}, {pipeline_mode = #tpu.pipeline_mode<synchronous>, transform_indices = @transform_10, window_bounds = array<i64: 1, 32>}, {pipeline_mode = #tpu.pipeline_mode<synchronous>, transform_indices = @transform_11, window_bounds = array<i64: 32, 1>}, {pipeline_mode = #tpu.pipeline_mode<synchronous>, transform_indices = @transform_12, window_bounds = array<i64: 1, 1>}, {transform_indices = @transform_13, window_bounds = array<i64: 16, 1>}, {transform_indices = @transform_14, window_bounds = array<i64: 16, 128>}]} {
    %c0 = arith.constant 0 : index
    %c0_0 = arith.constant 0 : index
    %0 = vector.load %arg1[%c0, %c0_0] : memref<16x16xf32, #tpu.memory_space<vmem>>, vector<16x16xf32>
    %c0_1 = arith.constant 0 : index
    %c0_2 = arith.constant 0 : index
    %1 = vector.load %arg2[%c0_1, %c0_2] : memref<16x32xf32, #tpu.memory_space<vmem>>, vector<16x32xf32>
    %cst = arith.constant dense<0.000000e+00> : vector<16x32xf32>
    %2 = tpu.matmul %0, %1, %cst {dimension_numbers = #tpu.dot_dimension_numbers<[1], [0], [0], [1], [0, 0, 1, 1], [], []>} : vector<16x16xf32>, vector<16x32xf32>, vector<16x32xf32> -> vector<16x32xf32>
    %c0_3 = arith.constant 0 : index
    %c0_4 = arith.constant 0 : index
    %3 = vector.load %arg3[%c0_3, %c0_4] : memref<1x32xf32, #tpu.memory_space<vmem>>, vector<1x32xf32>
    %4 = vector.broadcast %3 : vector<1x32xf32> to vector<16x32xf32>
    %5 = arith.addf %2, %4 : vector<16x32xf32>
    %cst_5 = arith.constant 0.000000e+00 : f32
    %6 = vector.broadcast %cst_5 : f32 to vector<16x32xf32>
    %7 = arith.maximumf %5, %6 : vector<16x32xf32>
    %c0_6 = arith.constant 0 : index
    %c0_7 = arith.constant 0 : index
    %8 = vector.load %arg4[%c0_6, %c0_7] : memref<32x64xf32, #tpu.memory_space<vmem>>, vector<32x64xf32>
    %cst_8 = arith.constant dense<0.000000e+00> : vector<16x64xf32>
    %9 = tpu.matmul %7, %8, %cst_8 {dimension_numbers = #tpu.dot_dimension_numbers<[1], [0], [0], [1], [0, 0, 1, 1], [], []>} : vector<16x32xf32>, vector<32x64xf32>, vector<16x64xf32> -> vector<16x64xf32>
    %c0_9 = arith.constant 0 : index
    %c0_10 = arith.constant 0 : index
    %10 = vector.load %arg5[%c0_9, %c0_10] : memref<1x64xf32, #tpu.memory_space<vmem>>, vector<1x64xf32>
    %11 = vector.broadcast %10 : vector<1x64xf32> to vector<16x64xf32>
    %12 = arith.addf %9, %11 : vector<16x64xf32>
    %cst_11 = arith.constant 0.000000e+00 : f32
    %13 = vector.broadcast %cst_11 : f32 to vector<16x64xf32>
    %14 = arith.maximumf %12, %13 : vector<16x64xf32>
    %c0_12 = arith.constant 0 : index
    %c0_13 = arith.constant 0 : index
    %15 = vector.load %arg6[%c0_12, %c0_13] : memref<64x128xf32, #tpu.memory_space<vmem>>, vector<64x128xf32>
    %cst_14 = arith.constant dense<0.000000e+00> : vector<16x128xf32>
    %16 = tpu.matmul %14, %15, %cst_14 {dimension_numbers = #tpu.dot_dimension_numbers<[1], [0], [0], [1], [0, 0, 1, 1], [], []>} : vector<16x64xf32>, vector<64x128xf32>, vector<16x128xf32> -> vector<16x128xf32>
    %c0_15 = arith.constant 0 : index
    %c0_16 = arith.constant 0 : index
    %17 = vector.load %arg7[%c0_15, %c0_16] : memref<1x128xf32, #tpu.memory_space<vmem>>, vector<1x128xf32>
    %18 = vector.broadcast %17 : vector<1x128xf32> to vector<16x128xf32>
    %19 = arith.addf %16, %18 : vector<16x128xf32>
    %cst_17 = arith.constant 0.000000e+00 : f32
    %20 = vector.broadcast %cst_17 : f32 to vector<16x128xf32>
    %21 = arith.maximumf %19, %20 : vector<16x128xf32>
    %c0_18 = arith.constant 0 : index
    %c0_19 = arith.constant 0 : index
    %22 = vector.load %arg15[%c0_18, %c0_19] : memref<16x128xf32, #tpu.memory_space<vmem>>, vector<16x128xf32>
    tpu.vector_store %arg15[%c0_18, %c0_19], %21 {strides = array<i32>} : memref<16x128xf32, #tpu.memory_space<vmem>>, vector<16x128xf32>,
    %c0_20 = arith.constant 0 : index
    %c0_21 = arith.constant 0 : index
    %23 = vector.load %arg8[%c0_20, %c0_21] : memref<128x64xf32, #tpu.memory_space<vmem>>, vector<128x64xf32>
    %cst_22 = arith.constant dense<0.000000e+00> : vector<16x64xf32>
    %24 = tpu.matmul %21, %23, %cst_22 {dimension_numbers = #tpu.dot_dimension_numbers<[1], [0], [0], [1], [0, 0, 1, 1], [], []>} : vector<16x128xf32>, vector<128x64xf32>, vector<16x64xf32> -> vector<16x64xf32>
    %c0_23 = arith.constant 0 : index
    %c0_24 = arith.constant 0 : index
    %25 = vector.load %arg9[%c0_23, %c0_24] : memref<1x64xf32, #tpu.memory_space<vmem>>, vector<1x64xf32>
    %26 = vector.broadcast %25 : vector<1x64xf32> to vector<16x64xf32>
    %27 = arith.addf %24, %26 : vector<16x64xf32>
    %cst_25 = arith.constant 0.000000e+00 : f32
    %28 = vector.broadcast %cst_25 : f32 to vector<16x64xf32>
    %29 = arith.maximumf %27, %28 : vector<16x64xf32>
    %c0_26 = arith.constant 0 : index
    %c0_27 = arith.constant 0 : index
    %30 = vector.load %arg10[%c0_26, %c0_27] : memref<64x32xf32, #tpu.memory_space<vmem>>, vector<64x32xf32>
    %cst_28 = arith.constant dense<0.000000e+00> : vector<16x32xf32>
    %31 = tpu.matmul %29, %30, %cst_28 {dimension_numbers = #tpu.dot_dimension_numbers<[1], [0], [0], [1], [0, 0, 1, 1], [], []>} : vector<16x64xf32>, vector<64x32xf32>, vector<16x32xf32> -> vector<16x32xf32>
    %c0_29 = arith.constant 0 : index
    %c0_30 = arith.constant 0 : index
    %32 = vector.load %arg11[%c0_29, %c0_30] : memref<1x32xf32, #tpu.memory_space<vmem>>, vector<1x32xf32>
    %33 = vector.broadcast %32 : vector<1x32xf32> to vector<16x32xf32>
    %34 = arith.addf %31, %33 : vector<16x32xf32>
    %cst_31 = arith.constant 0.000000e+00 : f32
    %35 = vector.broadcast %cst_31 : f32 to vector<16x32xf32>
    %36 = arith.maximumf %34, %35 : vector<16x32xf32>
    %c0_32 = arith.constant 0 : index
    %c0_33 = arith.constant 0 : index
    %37 = vector.load %arg12[%c0_32, %c0_33] : memref<32x1xf32, #tpu.memory_space<vmem>>, vector<32x1xf32>
    %cst_34 = arith.constant dense<0.000000e+00> : vector<16x1xf32>
    %38 = tpu.matmul %36, %37, %cst_34 {dimension_numbers = #tpu.dot_dimension_numbers<[1], [0], [0], [1], [0, 0, 1, 1], [], []>} : vector<16x32xf32>, vector<32x1xf32>, vector<16x1xf32> -> vector<16x1xf32>
    %c0_35 = arith.constant 0 : index
    %c0_36 = arith.constant 0 : index
    %39 = vector.load %arg13[%c0_35, %c0_36] : memref<1x1xf32, #tpu.memory_space<vmem>>, vector<1x1xf32>
    %40 = vector.broadcast %39 : vector<1x1xf32> to vector<16x1xf32>
    %41 = arith.addf %38, %40 : vector<16x1xf32>
    %c0_37 = arith.constant 0 : index
    %c0_38 = arith.constant 0 : index
    %42 = vector.load %arg14[%c0_37, %c0_38] : memref<16x1xf32, #tpu.memory_space<vmem>>, vector<16x1xf32>
    tpu.vector_store %arg14[%c0_37, %c0_38], %41 {strides = array<i32>} : memref<16x1xf32, #tpu.memory_space<vmem>>, vector<16x1xf32>,
    return
  }
  func.func @transform_0(%arg0: i32) -> (i32, i32) {
    %c0_i32 = arith.constant 0 : i32
    %c0_i32_0 = arith.constant 0 : i32
    return %arg0, %c0_i32 : i32, i32
  }
  func.func @transform_1(%arg0: i32) -> (i32, i32) {
    %c0_i32 = arith.constant 0 : i32
    %c0_i32_0 = arith.constant 0 : i32
    %c0_i32_1 = arith.constant 0 : i32
    return %c0_i32, %c0_i32_0 : i32, i32
  }
  func.func @transform_2(%arg0: i32) -> (i32, i32) {
    %c0_i32 = arith.constant 0 : i32
    %c0_i32_0 = arith.constant 0 : i32
    %c0_i32_1 = arith.constant 0 : i32
    return %c0_i32, %c0_i32_0 : i32, i32
  }
  func.func @transform_3(%arg0: i32) -> (i32, i32) {
    %c0_i32 = arith.constant 0 : i32
    %c0_i32_0 = arith.constant 0 : i32
    %c0_i32_1 = arith.constant 0 : i32
    return %c0_i32, %c0_i32_0 : i32, i32
  }
  func.func @transform_4(%arg0: i32) -> (i32, i32) {
    %c0_i32 = arith.constant 0 : i32
    %c0_i32_0 = arith.constant 0 : i32
    %c0_i32_1 = arith.constant 0 : i32
    return %c0_i32, %c0_i32_0 : i32, i32
  }
  func.func @transform_5(%arg0: i32) -> (i32, i32) {
    %c0_i32 = arith.constant 0 : i32
    %c0_i32_0 = arith.constant 0 : i32
    %c0_i32_1 = arith.constant 0 : i32
    return %c0_i32, %c0_i32_0 : i32, i32
  }
  func.func @transform_6(%arg0: i32) -> (i32, i32) {
    %c0_i32 = arith.constant 0 : i32
    %c0_i32_0 = arith.constant 0 : i32
    %c0_i32_1 = arith.constant 0 : i32
    return %c0_i32, %c0_i32_0 : i32, i32
  }
  func.func @transform_7(%arg0: i32) -> (i32, i32) {
    %c0_i32 = arith.constant 0 : i32
    %c0_i32_0 = arith.constant 0 : i32
    %c0_i32_1 = arith.constant 0 : i32
    return %c0_i32, %c0_i32_0 : i32, i32
  }
  func.func @transform_8(%arg0: i32) -> (i32, i32) {
    %c0_i32 = arith.constant 0 : i32
    %c0_i32_0 = arith.constant 0 : i32
    %c0_i32_1 = arith.constant 0 : i32
    return %c0_i32, %c0_i32_0 : i32, i32
  }
  func.func @transform_9(%arg0: i32) -> (i32, i32) {
    %c0_i32 = arith.constant 0 : i32
    %c0_i32_0 = arith.constant 0 : i32
    %c0_i32_1 = arith.constant 0 : i32
    return %c0_i32, %c0_i32_0 : i32, i32
  }
  func.func @transform_10(%arg0: i32) -> (i32, i32) {
    %c0_i32 = arith.constant 0 : i32
    %c0_i32_0 = arith.constant 0 : i32
    %c0_i32_1 = arith.constant 0 : i32
    return %c0_i32, %c0_i32_0 : i32, i32
  }
  func.func @transform_11(%arg0: i32) -> (i32, i32) {
    %c0_i32 = arith.constant 0 : i32
    %c0_i32_0 = arith.constant 0 : i32
    %c0_i32_1 = arith.constant 0 : i32
    return %c0_i32, %c0_i32_0 : i32, i32
  }
  func.func @transform_12(%arg0: i32) -> (i32, i32) {
    %c0_i32 = arith.constant 0 : i32
    %c0_i32_0 = arith.constant 0 : i32
    %c0_i32_1 = arith.constant 0 : i32
    return %c0_i32, %c0_i32_0 : i32, i32
  }
  func.func @transform_13(%arg0: i32) -> (i32, i32) {
    %c0_i32 = arith.constant 0 : i32
    %c0_i32_0 = arith.constant 0 : i32
    return %arg0, %c0_i32 : i32, i32
  }
  func.func @transform_14(%arg0: i32) -> (i32, i32) {
    %c0_i32 = arith.constant 0 : i32
    %c0_i32_0 = arith.constant 0 : i32
    return %arg0, %c0_i32 : i32, i32
  }
}

</mosaic_0001>

<llo_original>
// kernel: tpu_custom_call.1
$region0: #{tpu_custom_call.1}
  #allocation0 [shape = 'u32[]', space=smem, size = 0x4, offset = 0x4, fixed_abs, tag = 'smem constant byte address 0x4 - core index']
  #allocation1 [shape = 'u32[72,128]{1,0:T(1,128)}', space=vmem, size = 0x9000, scoped, tag = 'internal scratch']
  #allocation2 [shape = 'f32[1,1]{1,0:T(1,128)S(1)}', space=vmem, size = 0x200, scoped, tag = 'scoped memory for tpu_custom_call.1']
  %s0 = inlined_call_operand.vmem [shape: f32[16,16], index: 0, kind: input, shape index: {}]
  %s1 = inlined_call_operand.vmem [shape: f32[16,32], index: 1, kind: input, shape index: {}]
  %s2 = inlined_call_operand.vmem [shape: f32[1,32], index: 2, kind: input, shape index: {}]
  %s3 = inlined_call_operand.vmem [shape: f32[32,64], index: 3, kind: input, shape index: {}]
  %s4 = inlined_call_operand.vmem [shape: f32[1,64], index: 4, kind: input, shape index: {}]
  %s5 = inlined_call_operand.vmem [shape: f32[64,128], index: 5, kind: input, shape index: {}]
  %s6 = inlined_call_operand.vmem [shape: f32[1,128], index: 6, kind: input, shape index: {}]
  %s7 = inlined_call_operand.vmem [shape: f32[128,64], index: 7, kind: input, shape index: {}]
  %s8 = inlined_call_operand.vmem [shape: f32[1,64], index: 8, kind: input, shape index: {}]
  %s9 = inlined_call_operand.vmem [shape: f32[64,32], index: 9, kind: input, shape index: {}]
  %s10 = inlined_call_operand.vmem [shape: f32[1,32], index: 10, kind: input, shape index: {}]
  %s11 = inlined_call_operand.vmem [shape: f32[32,1], index: 11, kind: input, shape index: {}]
  %s12 = inlined_call_operand.<no memory space> [shape: f32[1,1], index: 12, kind: input, shape index: {}]
  %s13 = inlined_call_operand.vmem [shape: f32[16,1], index: 13, kind: output, shape index: {0}]
  %s14 = inlined_call_operand.hbm [shape: f32[16,128], index: 14, kind: output, shape index: {1}]
  %15 = xla_tuple %s13, %s14
  %s16 = sld [smem:[#allocation0]]
  $region70: #{tpu_custom_call.1} parent=0
    _
  %s18 = ssub.s32 1, %s16
  %s19 = scalar_select 0, %s18, %s16
  %v20 = vstv %s12
  %21 = vst [vmem:[#allocation2] sm:$0x1] %v20
  $region1: #{tpu_custom_call.1} parent=0
    #allocation3 [shape = 'u8[8192]{0}', space=vmem, size = 0x2000, scoped, tag = 'output window, operand 1, single buffered']
    #allocation4 [shape = 's32[1]{0}', space=sflag, size = 0x4, scoped, tag = 'scoped memory for tpu_custom_call.1']
    %22 = vsyncpa [#allocation4], 0
    // Predicated region
    $region2: #{tpu_custom_call.1} parent=1 // pred_check
      _
    $region3: #{tpu_custom_call.1} parent=1 // pred_check_branch
      %24 = sbr.rel (0) target = $region5
    $region4: #{tpu_custom_call.1} parent=1 // pred_region
      _
    $region5: #{tpu_custom_call.1} parent=1 // pred_fallthru
      _
    // Predicated region
    $region6: #{tpu_custom_call.1} parent=1 // pred_check
      _
    $region7: #{tpu_custom_call.1} parent=1 // pred_check_branch
      %26 = sbr.rel (0) target = $region9
    $region8: #{tpu_custom_call.1} parent=1 // pred_region
      _
    $region9: #{tpu_custom_call.1} parent=1 // pred_fallthru
      _
    // Predicated region
    $region10: #{tpu_custom_call.1} parent=1 // pred_check
      _
    $region11: #{tpu_custom_call.1} parent=1 // pred_check_branch
      %28 = sbr.rel (0) target = $region13
    $region12: #{tpu_custom_call.1} parent=1 // pred_region
      _
    $region13: #{tpu_custom_call.1} parent=1 // pred_fallthru
      _
    // Predicated region
    $region14: #{tpu_custom_call.1} parent=1 // pred_check
      _
    $region15: #{tpu_custom_call.1} parent=1 // pred_check_branch
      %30 = sbr.rel (0) target = $region17
    $region16: #{tpu_custom_call.1} parent=1 // pred_region
      _
    $region17: #{tpu_custom_call.1} parent=1 // pred_fallthru
      _
    // Predicated region
    $region18: #{tpu_custom_call.1} parent=1 // pred_check
      _
    $region19: #{tpu_custom_call.1} parent=1 // pred_check_branch
      %32 = sbr.rel (0) target = $region21
    $region20: #{tpu_custom_call.1} parent=1 // pred_region
      _
    $region21: #{tpu_custom_call.1} parent=1 // pred_fallthru
      _
    // Predicated region
    $region22: #{tpu_custom_call.1} parent=1 // pred_check
      _
    $region23: #{tpu_custom_call.1} parent=1 // pred_check_branch
      %34 = sbr.rel (0) target = $region25
    $region24: #{tpu_custom_call.1} parent=1 // pred_region
      _
    $region25: #{tpu_custom_call.1} parent=1 // pred_fallthru
      _
    // Predicated region
    $region26: #{tpu_custom_call.1} parent=1 // pred_check
      _
    $region27: #{tpu_custom_call.1} parent=1 // pred_check_branch
      %36 = sbr.rel (0) target = $region29
    $region28: #{tpu_custom_call.1} parent=1 // pred_region
      _
    $region29: #{tpu_custom_call.1} parent=1 // pred_fallthru
      _
    // Predicated region
    $region30: #{tpu_custom_call.1} parent=1 // pred_check
      _
    $region31: #{tpu_custom_call.1} parent=1 // pred_check_branch
      %38 = sbr.rel (0) target = $region33
    $region32: #{tpu_custom_call.1} parent=1 // pred_region
      _
    $region33: #{tpu_custom_call.1} parent=1 // pred_fallthru
      _
    // Predicated region
    $region34: #{tpu_custom_call.1} parent=1 // pred_check
      _
    $region35: #{tpu_custom_call.1} parent=1 // pred_check_branch
      %40 = sbr.rel (0) target = $region37
    $region36: #{tpu_custom_call.1} parent=1 // pred_region
      _
    $region37: #{tpu_custom_call.1} parent=1 // pred_fallthru
      _
    // Predicated region
    $region38: #{tpu_custom_call.1} parent=1 // pred_check
      _
    $region39: #{tpu_custom_call.1} parent=1 // pred_check_branch
      %42 = sbr.rel (0) target = $region41
    $region40: #{tpu_custom_call.1} parent=1 // pred_region
      _
    $region41: #{tpu_custom_call.1} parent=1 // pred_fallthru
      _
    // Predicated region
    $region42: #{tpu_custom_call.1} parent=1 // pred_check
      _
    $region43: #{tpu_custom_call.1} parent=1 // pred_check_branch
      %44 = sbr.rel (0) target = $region45
    $region44: #{tpu_custom_call.1} parent=1 // pred_region
      _
    $region45: #{tpu_custom_call.1} parent=1 // pred_fallthru
      _
    // Predicated region
    $region46: #{tpu_custom_call.1} parent=1 // pred_check
      _
    $region47: #{tpu_custom_call.1} parent=1 // pred_check_branch
      %46 = sbr.rel (0) target = $region49
    $region48: #{tpu_custom_call.1} parent=1 // pred_region
      _
    $region49: #{tpu_custom_call.1} parent=1 // pred_fallthru
      _
    // Predicated region
    $region50: #{tpu_custom_call.1} parent=1 // pred_check
      _
    $region51: #{tpu_custom_call.1} parent=1 // pred_check_branch
      %48 = sbr.rel (0) target = $region53
    $region52: #{tpu_custom_call.1} parent=1 // pred_region
      _
    $region53: #{tpu_custom_call.1} parent=1 // pred_fallthru
      _
    %v49 = vld [vmem:[%s0] sm:$0xff]
    %v50 = vld [vmem:[%s0 + $0x8] sm:$0xff]
    %v51 = vld [vmem:[%s1] sm:$0xff]
    %v52 = vld [vmem:[%s1 + $0x8] sm:$0xff]
    %v53 = vld [vmem:[%s2] sm:$0x1]
    %v55 = vperm.slane %v53, 0
    %vm57 = vcmask 130048
    %v59 = vsel %vm57, %v49, 0
    %v62 = vsel %vm57, %v50, 0
    %64 = vmatpush.msra.mxu0 0.0
    %65 = vmatpush.msra.mxu0 0.0
    %66 = vmatpush.msra.mxu0 0.0
    %67 = vmatpush.msra.mxu0 0.0
    %68 = vmatpush.msra.mxu0 0.0
    %69 = vmatpush.msra.mxu0 0.0
    %70 = vmatpush.msra.mxu0 0.0
    %71 = vmatpush.msra.mxu0 0.0
    %72 = vmatpush.msra.mxu0 0.0
    %73 = vmatpush.msra.mxu0 0.0
    %74 = vmatpush.msra.mxu0 0.0
    %75 = vmatpush.msra.mxu0 0.0
    %76 = vmatpush.msra.mxu0 0.0
    %77 = vmatpush.msra.mxu0 0.0
    %78 = vmatpush.msra.mxu0 %v52
    %79 = vmatpush.msra.mxu0 %v51
    %80 = vmatmul.f32.gmra.mxu0 %v59
    %v81 = vpop.f32.mrf.mxu0
    %v82 = vadd.f32 %v55, %v81
    %83 = vmatmul.f32.gmra.mxu0 %v62
    %v84 = vpop.f32.mrf.mxu0
    %v85 = vadd.f32 %v55, %v84
    %86 = vdwg.mxu0
    %v87 = vmax.f32 %v82, 0.0
    %v88 = vmax.f32 %v85, 0.0
    %v89 = vld [vmem:[%s3] sm:$0xff]
    %v90 = vld [vmem:[%s3 + $0x8] sm:$0xff]
    %v91 = vld [vmem:[%s3 + $0x10] sm:$0xff]
    %v92 = vld [vmem:[%s3 + $0x18] sm:$0xff]
    %v93 = vld [vmem:[%s4] sm:$0x1]
    %v95 = vperm.slane %v93, 0
    %vm97 = vcmask 261120
    %v99 = vsel %vm97, %v87, 0
    %v102 = vsel %vm97, %v88, 0
    %104 = vmatpush.msra.mxu0 0.0
    %105 = vmatpush.msra.mxu0 0.0
    %106 = vmatpush.msra.mxu0 0.0
    %107 = vmatpush.msra.mxu0 0.0
    %108 = vmatpush.msra.mxu0 0.0
    %109 = vmatpush.msra.mxu0 0.0
    %110 = vmatpush.msra.mxu0 0.0
    %111 = vmatpush.msra.mxu0 0.0
    %112 = vmatpush.msra.mxu0 0.0
    %113 = vmatpush.msra.mxu0 0.0
    %114 = vmatpush.msra.mxu0 0.0
    %115 = vmatpush.msra.mxu0 0.0
    %116 = vmatpush.msra.mxu0 %v92
    %117 = vmatpush.msra.mxu0 %v91
    %118 = vmatpush.msra.mxu0 %v90
    %119 = vmatpush.msra.mxu0 %v89
    %120 = vmatmul.f32.gmra.mxu0 %v99
    %v121 = vpop.f32.mrf.mxu0
    %v122 = vadd.f32 %v95, %v121
    %123 = vmatmul.f32.gmra.mxu0 %v102
    %v124 = vpop.f32.mrf.mxu0
    %v125 = vadd.f32 %v95, %v124
    %126 = vdwg.mxu0
    %v127 = vmax.f32 %v122, 0.0
    %v128 = vmax.f32 %v125, 0.0
    %v129 = vld [vmem:[%s5] sm:$0xff]
    %v130 = vld [vmem:[%s5 + $0x8] sm:$0xff]
    %v131 = vld [vmem:[%s5 + $0x10] sm:$0xff]
    %v132 = vld [vmem:[%s5 + $0x18] sm:$0xff]
    %v133 = vld [vmem:[%s5 + $0x20] sm:$0xff]
    %v134 = vld [vmem:[%s5 + $0x28] sm:$0xff]
    %v135 = vld [vmem:[%s5 + $0x30] sm:$0xff]
    %v136 = vld [vmem:[%s5 + $0x38] sm:$0xff]
    %v137 = vld [vmem:[%s6] sm:$0x1]
    %v139 = vperm.slane %v137, 0
    %vm141 = vcmask 523264
    %v143 = vsel %vm141, %v127, 0
    %v146 = vsel %vm141, %v128, 0
    %148 = vmatpush.msra.mxu0 0.0
    %149 = vmatpush.msra.mxu0 0.0
    %150 = vmatpush.msra.mxu0 0.0
    %151 = vmatpush.msra.mxu0 0.0
    %152 = vmatpush.msra.mxu0 0.0
    %153 = vmatpush.msra.mxu0 0.0
    %154 = vmatpush.msra.mxu0 0.0
    %155 = vmatpush.msra.mxu0 0.0
    %156 = vmatpush.msra.mxu0 %v136
    %157 = vmatpush.msra.mxu0 %v135
    %158 = vmatpush.msra.mxu0 %v134
    %159 = vmatpush.msra.mxu0 %v133
    %160 = vmatpush.msra.mxu0 %v132
    %161 = vmatpush.msra.mxu0 %v131
    %162 = vmatpush.msra.mxu0 %v130
    %163 = vmatpush.msra.mxu0 %v129
    %164 = vmatmul.f32.gmra.mxu0 %v143
    %v165 = vpop.f32.mrf.mxu0
    %v166 = vadd.f32 %v139, %v165
    %167 = vmatmul.f32.gmra.mxu0 %v146
    %v168 = vpop.f32.mrf.mxu0
    %v169 = vadd.f32 %v139, %v168
    %170 = vdwg.mxu0
    %v171 = vmax.f32 %v166, 0.0
    %v172 = vmax.f32 %v169, 0.0
    %173 = vst [vmem:[#allocation3] sm:$0xff] %v171
    %174 = vst [vmem:[#allocation3 + $0x8] sm:$0xff] %v172
    %v175 = vld [vmem:[%s7] sm:$0xff]
    %v176 = vld [vmem:[%s7 + $0x8] sm:$0xff]
    %v177 = vld [vmem:[%s7 + $0x10] sm:$0xff]
    %v178 = vld [vmem:[%s7 + $0x18] sm:$0xff]
    %v179 = vld [vmem:[%s7 + $0x20] sm:$0xff]
    %v180 = vld [vmem:[%s7 + $0x28] sm:$0xff]
    %v181 = vld [vmem:[%s7 + $0x30] sm:$0xff]
    %v182 = vld [vmem:[%s7 + $0x38] sm:$0xff]
    %v183 = vld [vmem:[%s7 + $0x40] sm:$0xff]
    %v184 = vld [vmem:[%s7 + $0x48] sm:$0xff]
    %v185 = vld [vmem:[%s7 + $0x50] sm:$0xff]
    %v186 = vld [vmem:[%s7 + $0x58] sm:$0xff]
    %v187 = vld [vmem:[%s7 + $0x60] sm:$0xff]
    %v188 = vld [vmem:[%s7 + $0x68] sm:$0xff]
    %v189 = vld [vmem:[%s7 + $0x70] sm:$0xff]
    %v190 = vld [vmem:[%s7 + $0x78] sm:$0xff]
    %v191 = vld [vmem:[%s8] sm:$0x1]
    %v193 = vperm.slane %v191, 0
    %195 = vmatpush.msra.mxu0 %v190
    %196 = vmatpush.msra.mxu0 %v189
    %197 = vmatpush.msra.mxu0 %v188
    %198 = vmatpush.msra.mxu0 %v187
    %199 = vmatpush.msra.mxu0 %v186
    %200 = vmatpush.msra.mxu0 %v185
    %201 = vmatpush.msra.mxu0 %v184
    %202 = vmatpush.msra.mxu0 %v183
    %203 = vmatpush.msra.mxu0 %v182
    %204 = vmatpush.msra.mxu0 %v181
    %205 = vmatpush.msra.mxu0 %v180
    %206 = vmatpush.msra.mxu0 %v179
    %207 = vmatpush.msra.mxu0 %v178
    %208 = vmatpush.msra.mxu0 %v177
    %209 = vmatpush.msra.mxu0 %v176
    %210 = vmatpush.msra.mxu0 %v175
    %211 = vmatmul.f32.gmra.mxu0 %v171
    %v212 = vpop.f32.mrf.mxu0
    %v213 = vadd.f32 %v193, %v212
    %214 = vmatmul.f32.gmra.mxu0 %v172
    %v215 = vpop.f32.mrf.mxu0
    %v216 = vadd.f32 %v193, %v215
    %217 = vdwg.mxu0
    %v218 = vmax.f32 %v213, 0.0
    %v219 = vmax.f32 %v216, 0.0
    %v220 = vld [vmem:[%s9] sm:$0xff]
    %v221 = vld [vmem:[%s9 + $0x8] sm:$0xff]
    %v222 = vld [vmem:[%s9 + $0x10] sm:$0xff]
    %v223 = vld [vmem:[%s9 + $0x18] sm:$0xff]
    %v224 = vld [vmem:[%s9 + $0x20] sm:$0xff]
    %v225 = vld [vmem:[%s9 + $0x28] sm:$0xff]
    %v226 = vld [vmem:[%s9 + $0x30] sm:$0xff]
    %v227 = vld [vmem:[%s9 + $0x38] sm:$0xff]
    %v228 = vld [vmem:[%s10] sm:$0x1]
    %v230 = vperm.slane %v228, 0
    %v233 = vsel %vm141, %v218, 0
    %v236 = vsel %vm141, %v219, 0
    %238 = vmatpush.msra.mxu0 0.0
    %239 = vmatpush.msra.mxu0 0.0
    %240 = vmatpush.msra.mxu0 0.0
    %241 = vmatpush.msra.mxu0 0.0
    %242 = vmatpush.msra.mxu0 0.0
    %243 = vmatpush.msra.mxu0 0.0
    %244 = vmatpush.msra.mxu0 0.0
    %245 = vmatpush.msra.mxu0 0.0
    %246 = vmatpush.msra.mxu0 %v227
    %247 = vmatpush.msra.mxu0 %v226
    %248 = vmatpush.msra.mxu0 %v225
    %249 = vmatpush.msra.mxu0 %v224
    %250 = vmatpush.msra.mxu0 %v223
    %251 = vmatpush.msra.mxu0 %v222
    %252 = vmatpush.msra.mxu0 %v221
    %253 = vmatpush.msra.mxu0 %v220
    %254 = vmatmul.f32.gmra.mxu0 %v233
    %v255 = vpop.f32.mrf.mxu0
    %v256 = vadd.f32 %v230, %v255
    %257 = vmatmul.f32.gmra.mxu0 %v236
    %v258 = vpop.f32.mrf.mxu0
    %v259 = vadd.f32 %v230, %v258
    %260 = vdwg.mxu0
    %v261 = vmax.f32 %v256, 0.0
    %v262 = vmax.f32 %v259, 0.0
    %v263 = vld [vmem:[%s11] sm:$0xff]
    %v264 = vld [vmem:[%s11 + $0x8] sm:$0xff]
    %v265 = vld [vmem:[%s11 + $0x10] sm:$0xff]
    %v266 = vld [vmem:[%s11 + $0x18] sm:$0xff]
    %v267 = vld [vmem:[#allocation2] sm:$0x1]
    %v269 = vperm.slane %v267, 0
    %v272 = vsel %vm97, %v261, 0
    %v275 = vsel %vm97, %v262, 0
    %277 = vmatpush.msra.mxu0 0.0
    %278 = vmatpush.msra.mxu0 0.0
    %279 = vmatpush.msra.mxu0 0.0
    %280 = vmatpush.msra.mxu0 0.0
    %281 = vmatpush.msra.mxu0 0.0
    %282 = vmatpush.msra.mxu0 0.0
    %283 = vmatpush.msra.mxu0 0.0
    %284 = vmatpush.msra.mxu0 0.0
    %285 = vmatpush.msra.mxu0 0.0
    %286 = vmatpush.msra.mxu0 0.0
    %287 = vmatpush.msra.mxu0 0.0
    %288 = vmatpush.msra.mxu0 0.0
    %289 = vmatpush.msra.mxu0 %v266
    %290 = vmatpush.msra.mxu0 %v265
    %291 = vmatpush.msra.mxu0 %v264
    %292 = vmatpush.msra.mxu0 %v263
    %293 = vmatmul.f32.gmra.mxu0 %v272
    %v294 = vpop.f32.mrf.mxu0
    %v295 = vadd.f32 %v269, %v294
    %296 = vmatmul.f32.gmra.mxu0 %v275
    %v297 = vpop.f32.mrf.mxu0
    %v298 = vadd.f32 %v269, %v297
    %299 = vdwg.mxu0
    %vm300 = vcmask 7168
    %301 = vst.msk [vmem:[%s13] sm:$0xff] %vm300, %v295
    %302 = vst.msk [vmem:[%s13 + $0x8] sm:$0xff] %vm300, %v298
    // Predicated region
    $region54: #{tpu_custom_call.1} parent=1 // pred_check
      _
    $region55: #{tpu_custom_call.1} parent=1 // pred_check_branch
      %304 = sbr.rel (0) target = $region57
    $region56: #{tpu_custom_call.1} parent=1 // pred_region
      _
    $region57: #{tpu_custom_call.1} parent=1 // pred_fallthru
      _
    // Predicated region
    $region58: #{tpu_custom_call.1} parent=1 // pred_check
      _
    $region59: #{tpu_custom_call.1} parent=1 // pred_check_branch
      %306 = sbr.rel (0) target = $region61
    $region60: #{tpu_custom_call.1} parent=1 // pred_region
      %308 = vsyncadd [#allocation4], 0
      %s309 = sshll.u32 [#allocation3], 4
      %s310 = int_to_ptr.vmem [resolvable:$true] %s309
      %s311 = sshll.u32 %s14, 4
      %s312 = int_to_ptr.hbm [resolvable:$true] %s311
      %317 = dma.vmem_to_hbm [thread:$0]  %s310, 256, %s312, [#allocation4], 128, 128, 8
    $region61: #{tpu_custom_call.1} parent=1 // pred_fallthru
      _
    // Predicated region
    $region62: #{tpu_custom_call.1} parent=1 // pred_check
      _
    $region63: #{tpu_custom_call.1} parent=1 // pred_check_branch
      %319 = sbr.rel (0) target = $region65
    $region64: #{tpu_custom_call.1} parent=1 // pred_region
      _
    $region65: #{tpu_custom_call.1} parent=1 // pred_fallthru
      _
    // Predicated region
    $region66: #{tpu_custom_call.1} parent=1 // pred_check
      _
    $region67: #{tpu_custom_call.1} parent=1 // pred_check_branch
      %321 = sbr.rel (0) target = $region69
    $region68: #{tpu_custom_call.1} parent=1 // pred_region
      %323 = dma.done [#allocation4], 256
    $region69: #{tpu_custom_call.1} parent=1 // pred_fallthru
      _
    %324 = vsyncpa [#allocation4], 1

</llo_original>
